<compile_context>
chip_gen: v7x
topology: tpu7x:2x2x1
jax: 0.10.0
libtpu: 0.0.40
codegen_flags: <defaults>
</compile_context>

<pallas_src>
import functools

import jax
import jax.numpy as jnp
from jax.experimental import pallas as pl
from jax.experimental.pallas import tpu as pltpu

_LANE = 128       # lane multiple for hidden dims.  TODO(synk): use 256 on
                  # v6e/v7x when hidden dims grow (2x256^2 MXU); 128 is optimal
                  # on v5e and fine for these toy dims.
_SUBLANE = 8      # sublane width (second-to-last dim)
_MAX_TILE_M = 512 # batch-tile cap (per-step overhead amortization)


def _round_up(n, m):
    return ((n + m - 1) // m) * m


# ----------------------------------------------------------------------------
# Pallas kernel: fused multi-layer  y = relu?(... relu?(x @ W0 + b0) ... @ WL + bL)
# ----------------------------------------------------------------------------
def _fused_mlp_kernel(*refs, relu_flags):
    """refs = (x_ref, w0_ref, b0_ref, w1_ref, b1_ref, ..., o_ref).

    All weights/biases are full (grid-invariant) VMEM blocks; the activation
    chain lives entirely in vregs / f32 accumulators, so the only HBM traffic
    per grid step is the x tile in and the output tile out.
    """
    x_ref, o_ref = refs[0], refs[-1]
    param_refs = refs[1:-1]
    n_layers = len(relu_flags)

    h = x_ref[...]                                  # native dtype into the MXU
    for i, relu in enumerate(relu_flags):           # static Python unroll
        w = param_refs[2 * i][...]
        b = param_refs[2 * i + 1][...]              # (1, N) broadcasts over rows
        acc = jnp.dot(h, w, preferred_element_type=jnp.float32)
        acc = acc + b.astype(jnp.float32)           # epilogue on f32 accumulator
        if relu:
            acc = jnp.maximum(acc, 0.0)
        if i + 1 < n_layers:
            h = acc.astype(w.dtype)                 # keep bf16 MXU fast path alive
        else:
            h = acc
    o_ref[...] = h.astype(o_ref.dtype)


def fused_mlp_pallas(x, padded_params, relu_flags, n_out, out_dtype=None):
    """Run the whole MLP stack as a single Pallas kernel.

    x:             [M, K]  (unpadded; K is a full-extent block)
    padded_params: tuple of (W [K_i, N_i], b [1, N_i]) per layer.  Hidden dims
                   are zero-padded to lane multiples; the first K and the last
                   N keep their true (unpadded) sizes so no wrapper pad/slice
                   copies are needed.
    Returns [M, n_out] in out_dtype (default: x.dtype).
    """
    M, K = x.shape
    out_dtype = out_dtype if out_dtype is not None else x.dtype

    # Large sublane-aligned batch tiles, but >= 2 grid steps when possible so
    # the "parallel" grid axis can shard across v7x's two TensorCores.
    tile_m = max(_SUBLANE, min(_MAX_TILE_M, _round_up(pl.cdiv(M, 2), _SUBLANE)))
    Mp = _round_up(M, tile_m)
    x_in = x if Mp == M else jnp.pad(x, ((0, Mp - M), (0, 0)))  # rows only

    flat_inputs = [x_in]
    in_specs = [pl.BlockSpec((tile_m, K), lambda i: (i, 0))]
    for w, b in padded_params:
        flat_inputs += [w, b]
        # Weights/biases: one full block, same block index every grid step
        # (grid-invariant -> DMA'd once, VMEM-resident).
        # TODO(synk): at real sizes add pipeline_mode=pl.Buffered(1) (single
        # buffer) for these grid-invariant operands to halve their VMEM cost
        # on v7x's 64 MiB VMEM.
        in_specs += [
            pl.BlockSpec(w.shape, lambda i: (0, 0)),
            pl.BlockSpec(b.shape, lambda i: (0, 0)),
        ]

    # Advisory cost estimate so XLA can schedule surrounding ops sensibly.
    flops = 2 * Mp * sum(int(w.shape[0]) * int(w.shape[1]) for w, _ in padded_params)
    bytes_accessed = (
        x_in.size * x_in.dtype.itemsize
        + sum(w.size * w.dtype.itemsize + b.size * b.dtype.itemsize
              for w, b in padded_params)
        + Mp * n_out * jnp.dtype(out_dtype).itemsize
    )

    kernel = functools.partial(_fused_mlp_kernel, relu_flags=tuple(relu_flags))
    out = pl.pallas_call(
        kernel,
        out_shape=jax.ShapeDtypeStruct((Mp, n_out), out_dtype),
        grid=(Mp // tile_m,),
        in_specs=in_specs,
        # n_out is the full array extent along the last dim -> legal block;
        # writing the true width avoids a post-kernel slice copy and 4x store
        # bandwidth inflation (masked stores are the cheaper tradeoff here).
        out_specs=pl.BlockSpec((tile_m, n_out), lambda i: (i, 0)),
        compiler_params=pltpu.CompilerParams(
            dimension_semantics=("parallel",),      # shard batch tiles on v7x
            vmem_limit_bytes=32 * 1024 * 1024,
        ),
        cost_estimate=pl.CostEstimate(
            flops=flops, transcendentals=0, bytes_accessed=int(bytes_accessed)),
    )(*flat_inputs)

    return out if Mp == M else out[:M]


# ----------------------------------------------------------------------------
# Layer wrappers (parameters are plain JAX arrays)
# ----------------------------------------------------------------------------
class LinearLayer:
    def __init__(self, key, in_features, out_features, relu=False,
                 dtype=jnp.float32):
        kw, kb = jax.random.split(key)
        bound = 1.0 / float(in_features) ** 0.5
        self.in_features = in_features
        self.out_features = out_features
        self.relu = relu
        # Mirrors nn.Linear's uniform(-1/sqrt(in), 1/sqrt(in)) init.
        self.w = jax.random.uniform(kw, (in_features, out_features),
                                    dtype=dtype, minval=-bound, maxval=bound)
        self.b = jax.random.uniform(kb, (1, out_features),
                                    dtype=dtype, minval=-bound, maxval=bound)

    def num_params(self):
        return self.w.size + self.b.size


class CheckpointedSequential:
    """JAX mirror of the PyTorch CheckpointedSequential.

    Forward semantics are identical: apply layers in order.  All layers are
    fused into a single Pallas kernel (forward outputs are unchanged by the
    fusion).  Gradient checkpointing only affects backward recomputation; this
    implementation records which layer indices are marked for checkpointing
    but is forward-only.
    # TODO(synk): backward/remat would need a custom_vjp with backward Pallas
    # kernels; wrapping jax.checkpoint around a VJP-less pallas_call would be
    # decorative, so it is intentionally not done here.
    """

    def __init__(self, *layers, checkpoint_segments=None, compute_dtype=None):
        if checkpoint_segments is None:
            checkpoint_segments = [
                i for i, l in enumerate(layers) if l.num_params() > 1_000_000
            ]
        elif isinstance(checkpoint_segments, int):
            checkpoint_segments = [checkpoint_segments]
        elif not hasattr(checkpoint_segments, "__iter__"):
            raise TypeError(
                "checkpoint_segments must be None, an int, or an iterable of ints"
            )
        self.checkpoint_segments = list(checkpoint_segments) or []
        self.layers = list(layers)

        # The MLP chain must line up (out_i == in_{i+1}).
        for a, b in zip(self.layers[:-1], self.layers[1:]):
            assert a.out_features == b.in_features

        relu_flags = tuple(l.relu for l in self.layers)
        n_out = self.layers[-1].out_features
        n_layers = len(self.layers)

        # Build the fused, lane-friendly parameter chain:
        #   * first layer keeps its true K (matches unpadded x),
        #   * last layer keeps its true N (output written unpadded),
        #   * hidden dims zero-padded to lane multiples (exact: zero rows/cols
        #     and zero bias lanes contribute nothing).
        padded = []
        for i, l in enumerate(self.layers):
            in_pad = l.in_features if i == 0 else _round_up(l.in_features, _LANE)
            out_pad = n_out if i == n_layers - 1 else _round_up(l.out_features, _LANE)
            w = jnp.pad(l.w, ((0, in_pad - l.in_features),
                              (0, out_pad - l.out_features)))
            b = jnp.pad(l.b, ((0, 0), (0, out_pad - l.out_features)))
            if compute_dtype is not None:
                w = w.astype(compute_dtype)
                b = b.astype(compute_dtype)
            padded.append((w, b))
        self._flat_params = tuple(padded)

        def forward(x, flat_params):
            out_dtype = x.dtype
            if compute_dtype is not None and x.dtype != compute_dtype:
                x = x.astype(compute_dtype)   # e.g. bf16 into the MXU on v6e/v7x
            return fused_mlp_pallas(x, flat_params, relu_flags, n_out,
                                    out_dtype=out_dtype)

        self._forward = jax.jit(forward)

    def __call__(self, x):
        return self._forward(x, self._flat_params)

    def get_checkpointed_indices(self):
        return self.checkpoint_segments.copy()

    def is_layer_checkpointed(self, index):
        return index in self.checkpoint_segments


# ----------------------------------------------------------------------------
# Main
# ----------------------------------------------------------------------------
if __name__ == "__main__":
    key = jax.random.PRNGKey(0)
    k_in, k0, k1, k2 = jax.random.split(key, 4)

    batch, d_in, d_hidden, d_out = 128, 32, 64, 32

    model = CheckpointedSequential(
        LinearLayer(k0, d_in, d_hidden, relu=True),
        LinearLayer(k1, d_hidden, d_hidden, relu=True),
        LinearLayer(k2, d_hidden, d_out, relu=False),
        checkpoint_segments=[1],      # explicitly mark the middle layer
        compute_dtype=None,           # f32 demo (exact); bf16 supported for v6e/v7x
    )

    x = jax.random.normal(k_in, (batch, d_in), dtype=jnp.float32)

    out = model(x)
    out = jax.block_until_ready(out)

    # Cross-check against a pure-JAX reference of the same forward pass
    # (unpadded weights, layer by layer).
    ref = x
    for layer in model.layers:
        ref = ref @ layer.w + layer.b
        if layer.relu:
            ref = jnp.maximum(ref, 0.0)

    assert out.shape == (batch, d_out)
    assert out.dtype == x.dtype
    assert jnp.allclose(out, ref, atol=1e-5, rtol=1e-5)
    assert model.get_checkpointed_indices() == [1]
    assert model.is_layer_checkpointed(1) and not model.is_layer_checkpointed(0)

    print("KERNEL_OK")
</pallas_src>

<mosaic_0001>
module attributes {stable_mosaic.version = 11 : i64} {
  func.func @_fused_mlp_kernel(%arg0: i32, %arg1: memref<64x32xf32, #tpu.memory_space<vmem>>, %arg2: memref<32x128xf32, #tpu.memory_space<vmem>>, %arg3: memref<1x128xf32, #tpu.memory_space<vmem>>, %arg4: memref<128x128xf32, #tpu.memory_space<vmem>>, %arg5: memref<1x128xf32, #tpu.memory_space<vmem>>, %arg6: memref<128x32xf32, #tpu.memory_space<vmem>>, %arg7: memref<1x32xf32, #tpu.memory_space<vmem>>, %arg8: memref<64x32xf32, #tpu.memory_space<vmem>>) attributes {dimension_semantics = [#tpu.dimension_semantics<parallel>], iteration_bounds = array<i64: 2>, scalar_prefetch = 0 : i64, scratch_operands = 0 : i64, tpu.core_type = #tpu.core_type<tc>, window_params = [{transform_indices = @transform_0, window_bounds = array<i64: 64, 32>}, {pipeline_mode = #tpu.pipeline_mode<synchronous>, transform_indices = @transform_1, window_bounds = array<i64: 32, 128>}, {pipeline_mode = #tpu.pipeline_mode<synchronous>, transform_indices = @transform_2, window_bounds = array<i64: 1, 128>}, {pipeline_mode = #tpu.pipeline_mode<synchronous>, transform_indices = @transform_3, window_bounds = array<i64: 128, 128>}, {pipeline_mode = #tpu.pipeline_mode<synchronous>, transform_indices = @transform_4, window_bounds = array<i64: 1, 128>}, {pipeline_mode = #tpu.pipeline_mode<synchronous>, transform_indices = @transform_5, window_bounds = array<i64: 128, 32>}, {pipeline_mode = #tpu.pipeline_mode<synchronous>, transform_indices = @transform_6, window_bounds = array<i64: 1, 32>}, {transform_indices = @transform_7, window_bounds = array<i64: 64, 32>}]} {
    %c0 = arith.constant 0 : index
    %c0_0 = arith.constant 0 : index
    %0 = vector.load %arg1[%c0, %c0_0] : memref<64x32xf32, #tpu.memory_space<vmem>>, vector<64x32xf32>
    %c0_1 = arith.constant 0 : index
    %c0_2 = arith.constant 0 : index
    %1 = vector.load %arg2[%c0_1, %c0_2] : memref<32x128xf32, #tpu.memory_space<vmem>>, vector<32x128xf32>
    %c0_3 = arith.constant 0 : index
    %c0_4 = arith.constant 0 : index
    %2 = vector.load %arg3[%c0_3, %c0_4] : memref<1x128xf32, #tpu.memory_space<vmem>>, vector<1x128xf32>
    %cst = arith.constant dense<0.000000e+00> : vector<64x128xf32>
    %3 = tpu.matmul %0, %1, %cst {dimension_numbers = #tpu.dot_dimension_numbers<[1], [0], [0], [1], [0, 0, 1, 1], [], []>} : vector<64x32xf32>, vector<32x128xf32>, vector<64x128xf32> -> vector<64x128xf32>
    %4 = vector.broadcast %2 : vector<1x128xf32> to vector<64x128xf32>
    %5 = arith.addf %3, %4 : vector<64x128xf32>
    %cst_5 = arith.constant 0.000000e+00 : f32
    %6 = vector.broadcast %cst_5 : f32 to vector<64x128xf32>
    %7 = arith.maximumf %5, %6 : vector<64x128xf32>
    %c0_6 = arith.constant 0 : index
    %c0_7 = arith.constant 0 : index
    %8 = vector.load %arg4[%c0_6, %c0_7] : memref<128x128xf32, #tpu.memory_space<vmem>>, vector<128x128xf32>
    %c0_8 = arith.constant 0 : index
    %c0_9 = arith.constant 0 : index
    %9 = vector.load %arg5[%c0_8, %c0_9] : memref<1x128xf32, #tpu.memory_space<vmem>>, vector<1x128xf32>
    %cst_10 = arith.constant dense<0.000000e+00> : vector<64x128xf32>
    %10 = tpu.matmul %7, %8, %cst_10 {dimension_numbers = #tpu.dot_dimension_numbers<[1], [0], [0], [1], [0, 0, 1, 1], [], []>} : vector<64x128xf32>, vector<128x128xf32>, vector<64x128xf32> -> vector<64x128xf32>
    %11 = vector.broadcast %9 : vector<1x128xf32> to vector<64x128xf32>
    %12 = arith.addf %10, %11 : vector<64x128xf32>
    %cst_11 = arith.constant 0.000000e+00 : f32
    %13 = vector.broadcast %cst_11 : f32 to vector<64x128xf32>
    %14 = arith.maximumf %12, %13 : vector<64x128xf32>
    %c0_12 = arith.constant 0 : index
    %c0_13 = arith.constant 0 : index
    %15 = vector.load %arg6[%c0_12, %c0_13] : memref<128x32xf32, #tpu.memory_space<vmem>>, vector<128x32xf32>
    %c0_14 = arith.constant 0 : index
    %c0_15 = arith.constant 0 : index
    %16 = vector.load %arg7[%c0_14, %c0_15] : memref<1x32xf32, #tpu.memory_space<vmem>>, vector<1x32xf32>
    %cst_16 = arith.constant dense<0.000000e+00> : vector<64x32xf32>
    %17 = tpu.matmul %14, %15, %cst_16 {dimension_numbers = #tpu.dot_dimension_numbers<[1], [0], [0], [1], [0, 0, 1, 1], [], []>} : vector<64x128xf32>, vector<128x32xf32>, vector<64x32xf32> -> vector<64x32xf32>
    %18 = vector.broadcast %16 : vector<1x32xf32> to vector<64x32xf32>
    %19 = arith.addf %17, %18 : vector<64x32xf32>
    %c0_17 = arith.constant 0 : index
    %c0_18 = arith.constant 0 : index
    %20 = vector.load %arg8[%c0_17, %c0_18] : memref<64x32xf32, #tpu.memory_space<vmem>>, vector<64x32xf32>
    tpu.vector_store %arg8[%c0_17, %c0_18], %19 {strides = array<i32>} : memref<64x32xf32, #tpu.memory_space<vmem>>, vector<64x32xf32>,
    return
  }
  func.func @transform_0(%arg0: i32) -> (i32, i32) {
    %c0_i32 = arith.constant 0 : i32
    %c0_i32_0 = arith.constant 0 : i32
    return %arg0, %c0_i32 : i32, i32
  }
  func.func @transform_1(%arg0: i32) -> (i32, i32) {
    %c0_i32 = arith.constant 0 : i32
    %c0_i32_0 = arith.constant 0 : i32
    %c0_i32_1 = arith.constant 0 : i32
    return %c0_i32, %c0_i32_0 : i32, i32
  }
  func.func @transform_2(%arg0: i32) -> (i32, i32) {
    %c0_i32 = arith.constant 0 : i32
    %c0_i32_0 = arith.constant 0 : i32
    %c0_i32_1 = arith.constant 0 : i32
    return %c0_i32, %c0_i32_0 : i32, i32
  }
  func.func @transform_3(%arg0: i32) -> (i32, i32) {
    %c0_i32 = arith.constant 0 : i32
    %c0_i32_0 = arith.constant 0 : i32
    %c0_i32_1 = arith.constant 0 : i32
    return %c0_i32, %c0_i32_0 : i32, i32
  }
  func.func @transform_4(%arg0: i32) -> (i32, i32) {
    %c0_i32 = arith.constant 0 : i32
    %c0_i32_0 = arith.constant 0 : i32
    %c0_i32_1 = arith.constant 0 : i32
    return %c0_i32, %c0_i32_0 : i32, i32
  }
  func.func @transform_5(%arg0: i32) -> (i32, i32) {
    %c0_i32 = arith.constant 0 : i32
    %c0_i32_0 = arith.constant 0 : i32
    %c0_i32_1 = arith.constant 0 : i32
    return %c0_i32, %c0_i32_0 : i32, i32
  }
  func.func @transform_6(%arg0: i32) -> (i32, i32) {
    %c0_i32 = arith.constant 0 : i32
    %c0_i32_0 = arith.constant 0 : i32
    %c0_i32_1 = arith.constant 0 : i32
    return %c0_i32, %c0_i32_0 : i32, i32
  }
  func.func @transform_7(%arg0: i32) -> (i32, i32) {
    %c0_i32 = arith.constant 0 : i32
    %c0_i32_0 = arith.constant 0 : i32
    return %arg0, %c0_i32 : i32, i32
  }
}

</mosaic_0001>

<llo_original>
// kernel: forward.1
$region0: #{forward.1}
  #allocation0 [shape = 'u32[]', space=smem, size = 0x4, offset = 0x4, fixed_abs, tag = 'smem constant byte address 0x4 - core index']
  #allocation1 [shape = 'u32[144,128]{1,0:T(1,128)}', space=vmem, size = 0x12000, scoped, tag = 'internal scratch']
  %s0 = inlined_call_operand.vmem [shape: f32[128,32], index: 0, kind: input, shape index: {}]
  %s1 = inlined_call_operand.vmem [shape: f32[32,128], index: 1, kind: input, shape index: {}]
  %s2 = inlined_call_operand.vmem [shape: f32[1,128], index: 2, kind: input, shape index: {}]
  %s3 = inlined_call_operand.vmem [shape: f32[128,128], index: 3, kind: input, shape index: {}]
  %s4 = inlined_call_operand.vmem [shape: f32[1,128], index: 4, kind: input, shape index: {}]
  %s5 = inlined_call_operand.vmem [shape: f32[128,32], index: 5, kind: input, shape index: {}]
  %s6 = inlined_call_operand.vmem [shape: f32[1,32], index: 6, kind: input, shape index: {}]
  %s7 = inlined_call_operand.vmem [shape: f32[128,32], index: 7, kind: output, shape index: {}]
  %s8 = sld [smem:[#allocation0]]
  $region61: #{forward.1} parent=0
    _
  %s10 = ssub.s32 1, %s8
  %s11 = scalar_select 0, %s10, %s8
  loop: start=0, step=1, limit=4
  $region2: #{forward.1} parent=0 // loop_pre_header
    _
  $region3: #{forward.1} parent=0 // loop_header
    %s13 = sphi 0, %s17
    %p14 = scmp.ge.s32.totalorder %s13, 4
    %s23 = sphi 0, %s25
    %s26 = sphi 0, %s23
    %s27 = sphi 0, %s26
    %s43 = sphi 0, %s27
    %s47 = sphi 0, %s47
    %s49 = sphi 0, %s47
    %s50 = sphi 0, %s49
    %s64 = sphi 0, %s50
    %s68 = sphi 0, %s68
    %s70 = sphi 0, %s68
    %s71 = sphi 0, %s70
    %s85 = sphi 0, %s71
    %s89 = sphi 0, %s89
    %s91 = sphi 0, %s89
    %s92 = sphi 0, %s91
    %s106 = sphi 0, %s92
    %s110 = sphi 0, %s110
    %s112 = sphi 0, %s110
    %s113 = sphi 0, %s112
    %s127 = sphi 0, %s113
    %s131 = sphi 0, %s131
    %s133 = sphi 0, %s131
    %s134 = sphi 0, %s133
    %s148 = sphi 0, %s134
    %s152 = sphi 0, %s152
    %s154 = sphi 0, %s152
    %s155 = sphi 0, %s154
    %s169 = sphi 0, %s155
    %s175 = sphi 0, %s177
    %s178 = sphi 0, %s175
    %s179 = sphi 0, %s178
    %s195 = sphi 0, %s179
  $region4: #{forward.1} parent=0 // loop_header_branch
    %16 = sbr.rel (%p14) target = $region8
  $region5: #{forward.1} parent=0 // loop_body
    %s18 = ssub.s32 %s13, 1
    %s19 = ssub.s32 %s13, 2
    %s20 = sadd.s32 %s13, 1
    %s21 = ssub.s32 %s13, %s20
    %p22 = scmp.eq.s32.totalorder %s21, 0
    %s24 = sadd.s32 %s23, 1
    %s25 = scalar_select %p22, %s23, %s24
    %p28 = pneg %p22
    %p29 = scmp.eq.s32.totalorder %s13, 1
    %p30 = por %p28, %p29
    %p31 = scmp.ne.s32.totalorder %s23, %s26
    %p32 = scmp.eq.s32.totalorder %s13, 0
    %p33 = por %p31, %p32
    %p34 = scmp.ne.s32.totalorder %s23, %s26
    %p35 = scmp.eq.s32.totalorder %s18, 1
    %p36 = por %p34, %p35
    %p37 = scmp.ne.s32.totalorder %s26, %s27
    %p38 = scmp.eq.s32.totalorder %s18, 0
    %p39 = por %p37, %p38
    %p40 = scmp.ne.s32.totalorder %s26, %s27
    %p41 = scmp.eq.s32.totalorder %s19, 1
    %p42 = por %p40, %p41
    %p44 = scmp.ne.s32.totalorder %s27, %s43
    %p45 = scmp.eq.s32.totalorder %s19, 0
    %p46 = por %p44, %p45
    %s48 = sadd.s32 %s47, 1
    %p51 = scmp.eq.s32.totalorder %s13, 1
    %p52 = scmp.ne.s32.totalorder %s47, %s49
    %p53 = scmp.eq.s32.totalorder %s13, 0
    %p54 = por %p52, %p53
    %p55 = scmp.ne.s32.totalorder %s47, %s49
    %p56 = scmp.eq.s32.totalorder %s18, 1
    %p57 = por %p55, %p56
    %p58 = scmp.ne.s32.totalorder %s49, %s50
    %p59 = scmp.eq.s32.totalorder %s18, 0
    %p60 = por %p58, %p59
    %p61 = scmp.ne.s32.totalorder %s49, %s50
    %p62 = scmp.eq.s32.totalorder %s19, 1
    %p63 = por %p61, %p62
    %p65 = scmp.ne.s32.totalorder %s50, %s64
    %p66 = scmp.eq.s32.totalorder %s19, 0
    %p67 = por %p65, %p66
    %s69 = sadd.s32 %s68, 1
    %p72 = scmp.eq.s32.totalorder %s13, 1
    %p73 = scmp.ne.s32.totalorder %s68, %s70
    %p74 = scmp.eq.s32.totalorder %s13, 0
    %p75 = por %p73, %p74
    %p76 = scmp.ne.s32.totalorder %s68, %s70
    %p77 = scmp.eq.s32.totalorder %s18, 1
    %p78 = por %p76, %p77
    %p79 = scmp.ne.s32.totalorder %s70, %s71
    %p80 = scmp.eq.s32.totalorder %s18, 0
    %p81 = por %p79, %p80
    %p82 = scmp.ne.s32.totalorder %s70, %s71
    %p83 = scmp.eq.s32.totalorder %s19, 1
    %p84 = por %p82, %p83
    %p86 = scmp.ne.s32.totalorder %s71, %s85
    %p87 = scmp.eq.s32.totalorder %s19, 0
    %p88 = por %p86, %p87
    %s90 = sadd.s32 %s89, 1
    %p93 = scmp.eq.s32.totalorder %s13, 1
    %p94 = scmp.ne.s32.totalorder %s89, %s91
    %p95 = scmp.eq.s32.totalorder %s13, 0
    %p96 = por %p94, %p95
    %p97 = scmp.ne.s32.totalorder %s89, %s91
    %p98 = scmp.eq.s32.totalorder %s18, 1
    %p99 = por %p97, %p98
    %p100 = scmp.ne.s32.totalorder %s91, %s92
    %p101 = scmp.eq.s32.totalorder %s18, 0
    %p102 = por %p100, %p101
    %p103 = scmp.ne.s32.totalorder %s91, %s92
    %p104 = scmp.eq.s32.totalorder %s19, 1
    %p105 = por %p103, %p104
    %p107 = scmp.ne.s32.totalorder %s92, %s106
    %p108 = scmp.eq.s32.totalorder %s19, 0
    %p109 = por %p107, %p108
    %s111 = sadd.s32 %s110, 1
    %p114 = scmp.eq.s32.totalorder %s13, 1
    %p115 = scmp.ne.s32.totalorder %s110, %s112
    %p116 = scmp.eq.s32.totalorder %s13, 0
    %p117 = por %p115, %p116
    %p118 = scmp.ne.s32.totalorder %s110, %s112
    %p119 = scmp.eq.s32.totalorder %s18, 1
    %p120 = por %p118, %p119
    %p121 = scmp.ne.s32.totalorder %s112, %s113
    %p122 = scmp.eq.s32.totalorder %s18, 0
    %p123 = por %p121, %p122
    %p124 = scmp.ne.s32.totalorder %s112, %s113
    %p125 = scmp.eq.s32.totalorder %s19, 1
    %p126 = por %p124, %p125
    %p128 = scmp.ne.s32.totalorder %s113, %s127
    %p129 = scmp.eq.s32.totalorder %s19, 0
    %p130 = por %p128, %p129
    %s132 = sadd.s32 %s131, 1
    %p135 = scmp.eq.s32.totalorder %s13, 1
    %p136 = scmp.ne.s32.totalorder %s131, %s133
    %p137 = scmp.eq.s32.totalorder %s13, 0
    %p138 = por %p136, %p137
    %p139 = scmp.ne.s32.totalorder %s131, %s133
    %p140 = scmp.eq.s32.totalorder %s18, 1
    %p141 = por %p139, %p140
    %p142 = scmp.ne.s32.totalorder %s133, %s134
    %p143 = scmp.eq.s32.totalorder %s18, 0
    %p144 = por %p142, %p143
    %p145 = scmp.ne.s32.totalorder %s133, %s134
    %p146 = scmp.eq.s32.totalorder %s19, 1
    %p147 = por %p145, %p146
    %p149 = scmp.ne.s32.totalorder %s134, %s148
    %p150 = scmp.eq.s32.totalorder %s19, 0
    %p151 = por %p149, %p150
    %s153 = sadd.s32 %s152, 1
    %p156 = scmp.eq.s32.totalorder %s13, 1
    %p157 = scmp.ne.s32.totalorder %s152, %s154
    %p158 = scmp.eq.s32.totalorder %s13, 0
    %p159 = por %p157, %p158
    %p160 = scmp.ne.s32.totalorder %s152, %s154
    %p161 = scmp.eq.s32.totalorder %s18, 1
    %p162 = por %p160, %p161
    %p163 = scmp.ne.s32.totalorder %s154, %s155
    %p164 = scmp.eq.s32.totalorder %s18, 0
    %p165 = por %p163, %p164
    %p166 = scmp.ne.s32.totalorder %s154, %s155
    %p167 = scmp.eq.s32.totalorder %s19, 1
    %p168 = por %p166, %p167
    %p170 = scmp.ne.s32.totalorder %s155, %s169
    %p171 = scmp.eq.s32.totalorder %s19, 0
    %p172 = por %p170, %p171
    %s173 = ssub.s32 %s13, %s20
    %p174 = scmp.eq.s32.totalorder %s173, 0
    %s176 = sadd.s32 %s175, 1
    %s177 = scalar_select %p174, %s175, %s176
    %p180 = pneg %p174
    %p181 = scmp.eq.s32.totalorder %s13, 1
    %p182 = por %p180, %p181
    %p183 = scmp.ne.s32.totalorder %s175, %s178
    %p184 = scmp.eq.s32.totalorder %s13, 0
    %p185 = por %p183, %p184
    %p186 = scmp.ne.s32.totalorder %s175, %s178
    %p187 = scmp.eq.s32.totalorder %s18, 1
    %p188 = por %p186, %p187
    %p189 = scmp.ne.s32.totalorder %s178, %s179
    %p190 = scmp.eq.s32.totalorder %s18, 0
    %p191 = por %p189, %p190
    %p192 = scmp.ne.s32.totalorder %s178, %s179
    %p193 = scmp.eq.s32.totalorder %s19, 1
    %p194 = por %p192, %p193
    %p196 = scmp.ne.s32.totalorder %s179, %s195
    %p197 = scmp.eq.s32.totalorder %s19, 0
    %p198 = por %p196, %p197
    %p199 = scmp.le.s32.totalorder 1, %s13
    %p200 = scmp.lt.s32.totalorder %s13, 3
    %p201 = pnand %p199, %p200
    %p202 = pneg %p201
    // Predicated region
    $region9: #{forward.1} parent=5 // pred_check
      _
    $region10: #{forward.1} parent=5 // pred_check_branch
      %204 = sbr.rel (%p201) target = $region12
    $region11: #{forward.1} parent=5 // pred_region
      %s205 = ssub.s32 %s13, 1
      // Predicated region
      $region13: #{forward.1} parent=11 // pred_check
        %p206 = pneg %p60
      $region14: #{forward.1} parent=11 // pred_check_branch
        %208 = sbr.rel (%p206) target = $region16
      $region15: #{forward.1} parent=11 // pred_region
        _
      $region16: #{forward.1} parent=11 // pred_fallthru
        _
      // Predicated region
      $region17: #{forward.1} parent=11 // pred_check
        %p209 = pneg %p81
      $region18: #{forward.1} parent=11 // pred_check_branch
        %211 = sbr.rel (%p209) target = $region20
      $region19: #{forward.1} parent=11 // pred_region
        _
      $region20: #{forward.1} parent=11 // pred_fallthru
        _
      // Predicated region
      $region21: #{forward.1} parent=11 // pred_check
        %p212 = pneg %p102
      $region22: #{forward.1} parent=11 // pred_check_branch
        %214 = sbr.rel (%p212) target = $region24
      $region23: #{forward.1} parent=11 // pred_region
        _
      $region24: #{forward.1} parent=11 // pred_fallthru
        _
      // Predicated region
      $region25: #{forward.1} parent=11 // pred_check
        %p215 = pneg %p123
      $region26: #{forward.1} parent=11 // pred_check_branch
        %217 = sbr.rel (%p215) target = $region28
      $region27: #{forward.1} parent=11 // pred_region
        _
      $region28: #{forward.1} parent=11 // pred_fallthru
        _
      // Predicated region
      $region29: #{forward.1} parent=11 // pred_check
        %p218 = pneg %p144
      $region30: #{forward.1} parent=11 // pred_check_branch
        %220 = sbr.rel (%p218) target = $region32
      $region31: #{forward.1} parent=11 // pred_region
        _
      $region32: #{forward.1} parent=11 // pred_fallthru
        _
      // Predicated region
      $region33: #{forward.1} parent=11 // pred_check
        %p221 = pneg %p165
      $region34: #{forward.1} parent=11 // pred_check_branch
        %223 = sbr.rel (%p221) target = $region36
      $region35: #{forward.1} parent=11 // pred_region
        _
      $region36: #{forward.1} parent=11 // pred_fallthru
        _
    $region12: #{forward.1} parent=5 // pred_fallthru
      _
    %p224 = scmp.lt.s32.totalorder %s13, 2
    // Predicated region
    $region37: #{forward.1} parent=5 // pred_check
      %p225 = pneg %p224
    $region38: #{forward.1} parent=5 // pred_check_branch
      %227 = sbr.rel (%p225) target = $region40
    $region39: #{forward.1} parent=5 // pred_region
      // Predicated region
      $region41: #{forward.1} parent=39 // pred_check
        %p228 = pneg %p33
      $region42: #{forward.1} parent=39 // pred_check_branch
        %230 = sbr.rel (%p228) target = $region44
      $region43: #{forward.1} parent=39 // pred_region
        %s231 = smul.u32 8, %s13
        %p232 = scmp.lt.s32.totalorder %s231, 15
        %s233 = scalar_select %p232, %s231, 15
        %s234 = smul.addr %s233, 8
        %s235 = scalar_lea.vmem %s0, %s234
        %s236 = smul.u32 8, %s13
      $region44: #{forward.1} parent=39 // pred_fallthru
        _
    $region40: #{forward.1} parent=5 // pred_fallthru
      _
    %p237 = scmp.le.s32.totalorder 1, %s13
    %p238 = scmp.lt.s32.totalorder %s13, 3
    %p239 = pnand %p237, %p238
    %p240 = pneg %p239
    // Predicated region
    $region45: #{forward.1} parent=5 // pred_check
      _
    $region46: #{forward.1} parent=5 // pred_check_branch
      %242 = sbr.rel (%p239) target = $region48
    $region47: #{forward.1} parent=5 // pred_region
      %s243 = ssub.s32 %s13, 1
      %s244 = smul.u32 8, %s18
      %p245 = scmp.lt.s32.totalorder %s244, 15
      %s246 = scalar_select %p245, %s244, 15
      %s247 = smul.addr %s246, 8
      %s248 = scalar_lea.vmem %s0, %s247
      %p249 = pneg %p39
      %p250 = pneg %p36
      %p251 = pneg %p60
      %p252 = pneg %p57
      %p253 = pneg %p81
      %p254 = pneg %p78
      %p255 = pneg %p102
      %p256 = pneg %p99
      %p257 = pneg %p123
      %p258 = pneg %p120
      %p259 = pneg %p144
      %p260 = pneg %p141
      %p261 = pneg %p165
      %p262 = pneg %p162
      %p263 = pneg %p191
      %p264 = pneg %p188
      %s265 = smul.u32 8, %s18
      %p266 = scmp.lt.s32.totalorder %s265, 15
      %s267 = scalar_select %p266, %s265, 15
      %s268 = smul.addr %s267, 8
      %s269 = scalar_lea.vmem %s7, %s268
      %s270 = smul.u32 8, %s18
      %p271 = scmp.lt.s32.totalorder %s270, 15
      %s272 = scalar_select %p271, %s270, 15
      %s273 = smul.addr %s272, 8
      %s274 = scalar_lea.vmem %s0, %s273
      %s275 = smul.u32 8, %s18
      %s276 = smul.u32 8, %s18
      %p277 = scmp.lt.s32.totalorder %s276, 15
      %s278 = scalar_select %p277, %s276, 15
      %s279 = smul.addr %s278, 8
      %s280 = scalar_lea.vmem %s7, %s279
      %s281 = smul.u32 8, %s18
      %v282 = vld [vmem:[%s274] sm:$0xff]
      %v283 = vld [vmem:[%s274 + $0x8] sm:$0xff]
      %v284 = vld [vmem:[%s274 + $0x10] sm:$0xff]
      %v285 = vld [vmem:[%s274 + $0x18] sm:$0xff]
      %v286 = vld [vmem:[%s274 + $0x20] sm:$0xff]
      %v287 = vld [vmem:[%s274 + $0x28] sm:$0xff]
      %v288 = vld [vmem:[%s274 + $0x30] sm:$0xff]
      %v289 = vld [vmem:[%s274 + $0x38] sm:$0xff]
      %v290 = vld [vmem:[%s1] sm:$0xff]
      %v291 = vld [vmem:[%s1 + $0x8] sm:$0xff]
      %v292 = vld [vmem:[%s1 + $0x10] sm:$0xff]
      %v293 = vld [vmem:[%s1 + $0x18] sm:$0xff]
      %v294 = vld [vmem:[%s2] sm:$0x1]
      %v296 = vlaneseq
      %v297 = vshrl.u32 %v296, 7
      %v298 = vsub.s32 0, %v297
      %v299 = vrot.slane %v294, %v298
      %vm301 = vcmask 261120
      %v303 = vsel %vm301, %v282, 0
      %v306 = vsel %vm301, %v283, 0
      %v309 = vsel %vm301, %v284, 0
      %v312 = vsel %vm301, %v285, 0
      %v315 = vsel %vm301, %v286, 0
      %v318 = vsel %vm301, %v287, 0
      %v321 = vsel %vm301, %v288, 0
      %v324 = vsel %vm301, %v289, 0
      %326 = vmatprep.subr.mxu0 0.0
      %327 = vmatpush1.msra.mxu0 %v290
      %328 = vmatprep.subr.mxu0 0.0
      %329 = vmatpush1.msra.mxu0 %v291
      %330 = vmatprep.subr.mxu0 0.0
      %331 = vmatpush1.msra.mxu0 %v292
      %332 = vmatprep.subr.mxu0 0.0
      %333 = vmatpush1.msra.mxu0 %v293
      %334 = vmatprep.subr.mxu0 0.0
      %335 = vmatpush1.msra.mxu0 0.0
      %336 = vmatprep.subr.mxu0 0.0
      %337 = vmatpush1.msra.mxu0 0.0
      %338 = vmatprep.subr.mxu0 0.0
      %339 = vmatpush1.msra.mxu0 0.0
      %340 = vmatprep.subr.mxu0 0.0
      %341 = vmatpush1.msra.mxu0 0.0
      %342 = vmatprep.subr.mxu0 0.0
      %343 = vmatpush1.msra.mxu0 0.0
      %344 = vmatprep.subr.mxu0 0.0
      %345 = vmatpush1.msra.mxu0 0.0
      %346 = vmatprep.subr.mxu0 0.0
      %347 = vmatpush1.msra.mxu0 0.0
      %348 = vmatprep.subr.mxu0 0.0
      %349 = vmatpush1.msra.mxu0 0.0
      %350 = vmatprep.subr.mxu0 0.0
      %351 = vmatpush1.msra.mxu0 0.0
      %352 = vmatprep.subr.mxu0 0.0
      %353 = vmatpush1.msra.mxu0 0.0
      %354 = vmatprep.subr.mxu0 0.0
      %355 = vmatpush1.msra.mxu0 0.0
      %356 = vmatprep.subr.mxu0 0.0
      %357 = vmatpush1.msra.mxu0 0.0
      %358 = vmatprep.subr.mxu0 0.0
      %359 = vmatpush1.msra.mxu0 0.0
      %360 = vmatprep.subr.mxu0 0.0
      %361 = vmatpush1.msra.mxu0 0.0
      %362 = vmatprep.subr.mxu0 0.0
      %363 = vmatpush1.msra.mxu0 0.0
      %364 = vmatprep.subr.mxu0 0.0
      %365 = vmatpush1.msra.mxu0 0.0
      %366 = vmatprep.subr.mxu0 0.0
      %367 = vmatpush1.msra.mxu0 0.0
      %368 = vmatprep.subr.mxu0 0.0
      %369 = vmatpush1.msra.mxu0 0.0
      %370 = vmatprep.subr.mxu0 0.0
      %371 = vmatpush1.msra.mxu0 0.0
      %372 = vmatprep.subr.mxu0 0.0
      %373 = vmatpush1.msra.mxu0 0.0
      %374 = vmatprep.subr.mxu0 0.0
      %375 = vmatpush1.msra.mxu0 0.0
      %376 = vmatprep.subr.mxu0 0.0
      %377 = vmatpush1.msra.mxu0 0.0
      %378 = vmatprep.subr.mxu0 0.0
      %379 = vmatpush1.msra.mxu0 0.0
      %380 = vmatprep.subr.mxu0 0.0
      %381 = vmatpush1.msra.mxu0 0.0
      %382 = vmatprep.subr.mxu0 0.0
      %383 = vmatpush1.msra.mxu0 0.0
      %384 = vmatprep.subr.mxu0 0.0
      %385 = vmatpush1.msra.mxu0 0.0
      %386 = vmatprep.subr.mxu0 0.0
      %387 = vmatpush1.msra.mxu0 0.0
      %388 = vmatprep.subr.mxu0 0.0
      %389 = vmatpush1.msra.mxu0 0.0
      %390 = vmatprep.mubr.f32.mxu0 0.0
      %391 = vmatmul.mubr.f32.gmra.mrb[0].mxu0 %v303
      %v392 = vpop.f32.mrb[0].mxu0
      %v393 = vadd.f32 %v299, %v392
      %v394 = vpop.f32.mrb[0].mxu0
      %395 = vmatprep.mubr.f32.mxu0 0.0
      %396 = vmatmul.mubr.f32.gmra.mrb[0].mxu0 %v306
      %v397 = vpop.f32.mrb[0].mxu0
      %v398 = vadd.f32 %v299, %v397
      %v399 = vpop.f32.mrb[0].mxu0
      %400 = vmatprep.mubr.f32.mxu0 0.0
      %401 = vmatmul.mubr.f32.gmra.mrb[0].mxu0 %v309
      %v402 = vpop.f32.mrb[0].mxu0
      %v403 = vadd.f32 %v299, %v402
      %v404 = vpop.f32.mrb[0].mxu0
      %405 = vmatprep.mubr.f32.mxu0 0.0
      %406 = vmatmul.mubr.f32.gmra.mrb[0].mxu0 %v312
      %v407 = vpop.f32.mrb[0].mxu0
      %v408 = vadd.f32 %v299, %v407
      %v409 = vpop.f32.mrb[0].mxu0
      %410 = vmatprep.mubr.f32.mxu0 0.0
      %411 = vmatmul.mubr.f32.gmra.mrb[0].mxu0 %v315
      %v412 = vpop.f32.mrb[0].mxu0
      %v413 = vadd.f32 %v299, %v412
      %v414 = vpop.f32.mrb[0].mxu0
      %415 = vmatprep.mubr.f32.mxu0 0.0
      %416 = vmatmul.mubr.f32.gmra.mrb[0].mxu0 %v318
      %v417 = vpop.f32.mrb[0].mxu0
      %v418 = vadd.f32 %v299, %v417
      %v419 = vpop.f32.mrb[0].mxu0
      %420 = vmatprep.mubr.f32.mxu0 0.0
      %421 = vmatmul.mubr.f32.gmra.mrb[0].mxu0 %v321
      %v422 = vpop.f32.mrb[0].mxu0
      %v423 = vadd.f32 %v299, %v422
      %v424 = vpop.f32.mrb[0].mxu0
      %425 = vmatprep.mubr.f32.mxu0 0.0
      %426 = vmatmul.mubr.f32.gmra.mrb[0].mxu0 %v324
      %v427 = vpop.f32.mrb[0].mxu0
      %v428 = vadd.f32 %v299, %v427
      %v429 = vpop.f32.mrb[0].mxu0
      %430 = vdwg.mxu0
      %v431 = vmax.f32 %v393, 0.0
      %v432 = vmax.f32 %v398, 0.0
      %v433 = vmax.f32 %v403, 0.0
      %v434 = vmax.f32 %v408, 0.0
      %v435 = vmax.f32 %v413, 0.0
      %v436 = vmax.f32 %v418, 0.0
      %v437 = vmax.f32 %v423, 0.0
      %v438 = vmax.f32 %v428, 0.0
      %v439 = vld [vmem:[%s3] sm:$0xff]
      %v440 = vld [vmem:[%s3 + $0x8] sm:$0xff]
      %v441 = vld [vmem:[%s3 + $0x10] sm:$0xff]
      %v442 = vld [vmem:[%s3 + $0x18] sm:$0xff]
      %v443 = vld [vmem:[%s3 + $0x20] sm:$0xff]
      %v444 = vld [vmem:[%s3 + $0x28] sm:$0xff]
      %v445 = vld [vmem:[%s3 + $0x30] sm:$0xff]
      %v446 = vld [vmem:[%s3 + $0x38] sm:$0xff]
      %v447 = vld [vmem:[%s3 + $0x40] sm:$0xff]
      %v448 = vld [vmem:[%s3 + $0x48] sm:$0xff]
      %v449 = vld [vmem:[%s3 + $0x50] sm:$0xff]
      %v450 = vld [vmem:[%s3 + $0x58] sm:$0xff]
      %v451 = vld [vmem:[%s3 + $0x60] sm:$0xff]
      %v452 = vld [vmem:[%s3 + $0x68] sm:$0xff]
      %v453 = vld [vmem:[%s3 + $0x70] sm:$0xff]
      %v454 = vld [vmem:[%s3 + $0x78] sm:$0xff]
      %v455 = vld [vmem:[%s4] sm:$0x1]
      %v457 = vlaneseq
      %v458 = vshrl.u32 %v457, 7
      %v459 = vsub.s32 0, %v458
      %v460 = vrot.slane %v455, %v459
      %462 = vmatprep.subr.mxu0 0.0
      %463 = vmatpush1.msra.mxu0 %v439
      %464 = vmatprep.subr.mxu0 0.0
      %465 = vmatpush1.msra.mxu0 %v440
      %466 = vmatprep.subr.mxu0 0.0
      %467 = vmatpush1.msra.mxu0 %v441
      %468 = vmatprep.subr.mxu0 0.0
      %469 = vmatpush1.msra.mxu0 %v442
      %470 = vmatprep.subr.mxu0 0.0
      %471 = vmatpush1.msra.mxu0 %v443
      %472 = vmatprep.subr.mxu0 0.0
      %473 = vmatpush1.msra.mxu0 %v444
      %474 = vmatprep.subr.mxu0 0.0
      %475 = vmatpush1.msra.mxu0 %v445
      %476 = vmatprep.subr.mxu0 0.0
      %477 = vmatpush1.msra.mxu0 %v446
      %478 = vmatprep.subr.mxu0 0.0
      %479 = vmatpush1.msra.mxu0 %v447
      %480 = vmatprep.subr.mxu0 0.0
      %481 = vmatpush1.msra.mxu0 %v448
      %482 = vmatprep.subr.mxu0 0.0
      %483 = vmatpush1.msra.mxu0 %v449
      %484 = vmatprep.subr.mxu0 0.0
      %485 = vmatpush1.msra.mxu0 %v450
      %486 = vmatprep.subr.mxu0 0.0
      %487 = vmatpush1.msra.mxu0 %v451
      %488 = vmatprep.subr.mxu0 0.0
      %489 = vmatpush1.msra.mxu0 %v452
      %490 = vmatprep.subr.mxu0 0.0
      %491 = vmatpush1.msra.mxu0 %v453
      %492 = vmatprep.subr.mxu0 0.0
      %493 = vmatpush1.msra.mxu0 %v454
      %494 = vmatprep.subr.mxu0 0.0
      %495 = vmatpush1.msra.mxu0 0.0
      %496 = vmatprep.subr.mxu0 0.0
      %497 = vmatpush1.msra.mxu0 0.0
      %498 = vmatprep.subr.mxu0 0.0
      %499 = vmatpush1.msra.mxu0 0.0
      %500 = vmatprep.subr.mxu0 0.0
      %501 = vmatpush1.msra.mxu0 0.0
      %502 = vmatprep.subr.mxu0 0.0
      %503 = vmatpush1.msra.mxu0 0.0
      %504 = vmatprep.subr.mxu0 0.0
      %505 = vmatpush1.msra.mxu0 0.0
      %506 = vmatprep.subr.mxu0 0.0
      %507 = vmatpush1.msra.mxu0 0.0
      %508 = vmatprep.subr.mxu0 0.0
      %509 = vmatpush1.msra.mxu0 0.0
      %510 = vmatprep.subr.mxu0 0.0
      %511 = vmatpush1.msra.mxu0 0.0
      %512 = vmatprep.subr.mxu0 0.0
      %513 = vmatpush1.msra.mxu0 0.0
      %514 = vmatprep.subr.mxu0 0.0
      %515 = vmatpush1.msra.mxu0 0.0
      %516 = vmatprep.subr.mxu0 0.0
      %517 = vmatpush1.msra.mxu0 0.0
      %518 = vmatprep.subr.mxu0 0.0
      %519 = vmatpush1.msra.mxu0 0.0
      %520 = vmatprep.subr.mxu0 0.0
      %521 = vmatpush1.msra.mxu0 0.0
      %522 = vmatprep.subr.mxu0 0.0
      %523 = vmatpush1.msra.mxu0 0.0
      %524 = vmatprep.subr.mxu0 0.0
      %525 = vmatpush1.msra.mxu0 0.0
      %526 = vmatprep.mubr.f32.mxu0 0.0
      %527 = vmatmul.mubr.f32.gmra.mrb[0].mxu0 %v431
      %v528 = vpop.f32.mrb[0].mxu0
      %v529 = vadd.f32 %v460, %v528
      %v530 = vpop.f32.mrb[0].mxu0
      %531 = vmatprep.mubr.f32.mxu0 0.0
      %532 = vmatmul.mubr.f32.gmra.mrb[0].mxu0 %v432
      %v533 = vpop.f32.mrb[0].mxu0
      %v534 = vadd.f32 %v460, %v533
      %v535 = vpop.f32.mrb[0].mxu0
      %536 = vmatprep.mubr.f32.mxu0 0.0
      %537 = vmatmul.mubr.f32.gmra.mrb[0].mxu0 %v433
      %v538 = vpop.f32.mrb[0].mxu0
      %v539 = vadd.f32 %v460, %v538
      %v540 = vpop.f32.mrb[0].mxu0
      %541 = vmatprep.mubr.f32.mxu0 0.0
      %542 = vmatmul.mubr.f32.gmra.mrb[0].mxu0 %v434
      %v543 = vpop.f32.mrb[0].mxu0
      %v544 = vadd.f32 %v460, %v543
      %v545 = vpop.f32.mrb[0].mxu0
      %546 = vmatprep.mubr.f32.mxu0 0.0
      %547 = vmatmul.mubr.f32.gmra.mrb[0].mxu0 %v435
      %v548 = vpop.f32.mrb[0].mxu0
      %v549 = vadd.f32 %v460, %v548
      %v550 = vpop.f32.mrb[0].mxu0
      %551 = vmatprep.mubr.f32.mxu0 0.0
      %552 = vmatmul.mubr.f32.gmra.mrb[0].mxu0 %v436
      %v553 = vpop.f32.mrb[0].mxu0
      %v554 = vadd.f32 %v460, %v553
      %v555 = vpop.f32.mrb[0].mxu0
      %556 = vmatprep.mubr.f32.mxu0 0.0
      %557 = vmatmul.mubr.f32.gmra.mrb[0].mxu0 %v437
      %v558 = vpop.f32.mrb[0].mxu0
      %v559 = vadd.f32 %v460, %v558
      %v560 = vpop.f32.mrb[0].mxu0
      %561 = vmatprep.mubr.f32.mxu0 0.0
      %562 = vmatmul.mubr.f32.gmra.mrb[0].mxu0 %v438
      %v563 = vpop.f32.mrb[0].mxu0
      %v564 = vadd.f32 %v460, %v563
      %v565 = vpop.f32.mrb[0].mxu0
      %566 = vdwg.mxu0
      %v567 = vmax.f32 %v529, 0.0
      %v568 = vmax.f32 %v534, 0.0
      %v569 = vmax.f32 %v539, 0.0
      %v570 = vmax.f32 %v544, 0.0
      %v571 = vmax.f32 %v549, 0.0
      %v572 = vmax.f32 %v554, 0.0
      %v573 = vmax.f32 %v559, 0.0
      %v574 = vmax.f32 %v564, 0.0
      %v575 = vld [vmem:[%s5] sm:$0xff]
      %v576 = vld [vmem:[%s5 + $0x8] sm:$0xff]
      %v577 = vld [vmem:[%s5 + $0x10] sm:$0xff]
      %v578 = vld [vmem:[%s5 + $0x18] sm:$0xff]
      %v579 = vld [vmem:[%s5 + $0x20] sm:$0xff]
      %v580 = vld [vmem:[%s5 + $0x28] sm:$0xff]
      %v581 = vld [vmem:[%s5 + $0x30] sm:$0xff]
      %v582 = vld [vmem:[%s5 + $0x38] sm:$0xff]
      %v583 = vld [vmem:[%s5 + $0x40] sm:$0xff]
      %v584 = vld [vmem:[%s5 + $0x48] sm:$0xff]
      %v585 = vld [vmem:[%s5 + $0x50] sm:$0xff]
      %v586 = vld [vmem:[%s5 + $0x58] sm:$0xff]
      %v587 = vld [vmem:[%s5 + $0x60] sm:$0xff]
      %v588 = vld [vmem:[%s5 + $0x68] sm:$0xff]
      %v589 = vld [vmem:[%s5 + $0x70] sm:$0xff]
      %v590 = vld [vmem:[%s5 + $0x78] sm:$0xff]
      %v591 = vld [vmem:[%s6] sm:$0x1]
      %v593 = vlaneseq
      %v594 = vshrl.u32 %v593, 7
      %v595 = vsub.s32 0, %v594
      %v596 = vrot.slane %v591, %v595
      %598 = vmatprep.subr.mxu0 0.0
      %599 = vmatpush1.msra.mxu0 %v575
      %600 = vmatprep.subr.mxu0 0.0
      %601 = vmatpush1.msra.mxu0 %v576
      %602 = vmatprep.subr.mxu0 0.0
      %603 = vmatpush1.msra.mxu0 %v577
      %604 = vmatprep.subr.mxu0 0.0
      %605 = vmatpush1.msra.mxu0 %v578
      %606 = vmatprep.subr.mxu0 0.0
      %607 = vmatpush1.msra.mxu0 %v579
      %608 = vmatprep.subr.mxu0 0.0
      %609 = vmatpush1.msra.mxu0 %v580
      %610 = vmatprep.subr.mxu0 0.0
      %611 = vmatpush1.msra.mxu0 %v581
      %612 = vmatprep.subr.mxu0 0.0
      %613 = vmatpush1.msra.mxu0 %v582
      %614 = vmatprep.subr.mxu0 0.0
      %615 = vmatpush1.msra.mxu0 %v583
      %616 = vmatprep.subr.mxu0 0.0
      %617 = vmatpush1.msra.mxu0 %v584
      %618 = vmatprep.subr.mxu0 0.0
      %619 = vmatpush1.msra.mxu0 %v585
      %620 = vmatprep.subr.mxu0 0.0
      %621 = vmatpush1.msra.mxu0 %v586
      %622 = vmatprep.subr.mxu0 0.0
      %623 = vmatpush1.msra.mxu0 %v587
      %624 = vmatprep.subr.mxu0 0.0
      %625 = vmatpush1.msra.mxu0 %v588
      %626 = vmatprep.subr.mxu0 0.0
      %627 = vmatpush1.msra.mxu0 %v589
      %628 = vmatprep.subr.mxu0 0.0
      %629 = vmatpush1.msra.mxu0 %v590
      %630 = vmatprep.subr.mxu0 0.0
      %631 = vmatpush1.msra.mxu0 0.0
      %632 = vmatprep.subr.mxu0 0.0
      %633 = vmatpush1.msra.mxu0 0.0
      %634 = vmatprep.subr.mxu0 0.0
      %635 = vmatpush1.msra.mxu0 0.0
      %636 = vmatprep.subr.mxu0 0.0
      %637 = vmatpush1.msra.mxu0 0.0
      %638 = vmatprep.subr.mxu0 0.0
      %639 = vmatpush1.msra.mxu0 0.0
      %640 = vmatprep.subr.mxu0 0.0
      %641 = vmatpush1.msra.mxu0 0.0
      %642 = vmatprep.subr.mxu0 0.0
      %643 = vmatpush1.msra.mxu0 0.0
      %644 = vmatprep.subr.mxu0 0.0
      %645 = vmatpush1.msra.mxu0 0.0
      %646 = vmatprep.subr.mxu0 0.0
      %647 = vmatpush1.msra.mxu0 0.0
      %648 = vmatprep.subr.mxu0 0.0
      %649 = vmatpush1.msra.mxu0 0.0
      %650 = vmatprep.subr.mxu0 0.0
      %651 = vmatpush1.msra.mxu0 0.0
      %652 = vmatprep.subr.mxu0 0.0
      %653 = vmatpush1.msra.mxu0 0.0
      %654 = vmatprep.subr.mxu0 0.0
      %655 = vmatpush1.msra.mxu0 0.0
      %656 = vmatprep.subr.mxu0 0.0
      %657 = vmatpush1.msra.mxu0 0.0
      %658 = vmatprep.subr.mxu0 0.0
      %659 = vmatpush1.msra.mxu0 0.0
      %660 = vmatprep.subr.mxu0 0.0
      %661 = vmatpush1.msra.mxu0 0.0
      %662 = vmatprep.mubr.f32.mxu0 0.0
      %663 = vmatmul.mubr.f32.gmra.mrb[0].mxu0 %v567
      %v664 = vpop.f32.mrb[0].mxu0
      %v665 = vadd.f32 %v596, %v664
      %v666 = vpop.f32.mrb[0].mxu0
      %667 = vmatprep.mubr.f32.mxu0 0.0
      %668 = vmatmul.mubr.f32.gmra.mrb[0].mxu0 %v568
      %v669 = vpop.f32.mrb[0].mxu0
      %v670 = vadd.f32 %v596, %v669
      %v671 = vpop.f32.mrb[0].mxu0
      %672 = vmatprep.mubr.f32.mxu0 0.0
      %673 = vmatmul.mubr.f32.gmra.mrb[0].mxu0 %v569
      %v674 = vpop.f32.mrb[0].mxu0
      %v675 = vadd.f32 %v596, %v674
      %v676 = vpop.f32.mrb[0].mxu0
      %677 = vmatprep.mubr.f32.mxu0 0.0
      %678 = vmatmul.mubr.f32.gmra.mrb[0].mxu0 %v570
      %v679 = vpop.f32.mrb[0].mxu0
      %v680 = vadd.f32 %v596, %v679
      %v681 = vpop.f32.mrb[0].mxu0
      %682 = vmatprep.mubr.f32.mxu0 0.0
      %683 = vmatmul.mubr.f32.gmra.mrb[0].mxu0 %v571
      %v684 = vpop.f32.mrb[0].mxu0
      %v685 = vadd.f32 %v596, %v684
      %v686 = vpop.f32.mrb[0].mxu0
      %687 = vmatprep.mubr.f32.mxu0 0.0
      %688 = vmatmul.mubr.f32.gmra.mrb[0].mxu0 %v572
      %v689 = vpop.f32.mrb[0].mxu0
      %v690 = vadd.f32 %v596, %v689
      %v691 = vpop.f32.mrb[0].mxu0
      %692 = vmatprep.mubr.f32.mxu0 0.0
      %693 = vmatmul.mubr.f32.gmra.mrb[0].mxu0 %v573
      %v694 = vpop.f32.mrb[0].mxu0
      %v695 = vadd.f32 %v596, %v694
      %v696 = vpop.f32.mrb[0].mxu0
      %697 = vmatprep.mubr.f32.mxu0 0.0
      %698 = vmatmul.mubr.f32.gmra.mrb[0].mxu0 %v574
      %v699 = vpop.f32.mrb[0].mxu0
      %v700 = vadd.f32 %v596, %v699
      %v701 = vpop.f32.mrb[0].mxu0
      %702 = vdwg.mxu0
      %703 = vst.msk [vmem:[%s280] sm:$0xff] %vm301, %v665
      %704 = vst.msk [vmem:[%s280 + $0x8] sm:$0xff] %vm301, %v670
      %705 = vst.msk [vmem:[%s280 + $0x10] sm:$0xff] %vm301, %v675
      %706 = vst.msk [vmem:[%s280 + $0x18] sm:$0xff] %vm301, %v680
      %707 = vst.msk [vmem:[%s280 + $0x20] sm:$0xff] %vm301, %v685
      %708 = vst.msk [vmem:[%s280 + $0x28] sm:$0xff] %vm301, %v690
      %709 = vst.msk [vmem:[%s280 + $0x30] sm:$0xff] %vm301, %v695
      %710 = vst.msk [vmem:[%s280 + $0x38] sm:$0xff] %vm301, %v700
      %s711 = smul.u32 8, %s18
      %p712 = scmp.lt.s32.totalorder %s711, 15
      %s713 = scalar_select %p712, %s711, 15
      %s714 = smul.addr %s713, 8
      %s715 = scalar_lea.vmem %s7, %s714
      // Predicated region
      $region49: #{forward.1} parent=47 // pred_check
        %p716 = pneg %p188
      $region50: #{forward.1} parent=47 // pred_check_branch
        %718 = sbr.rel (%p716) target = $region52
      $region51: #{forward.1} parent=47 // pred_region
        %s719 = smul.u32 8, %s18
      $region52: #{forward.1} parent=47 // pred_fallthru
        _
    $region48: #{forward.1} parent=5 // pred_fallthru
      _
    %p720 = scmp.le.s32.totalorder 2, %s13
    // Predicated region
    $region53: #{forward.1} parent=5 // pred_check
      %p721 = pneg %p720
    $region54: #{forward.1} parent=5 // pred_check_branch
      %723 = sbr.rel (%p721) target = $region56
    $region55: #{forward.1} parent=5 // pred_region
      %s724 = ssub.s32 %s13, 2
      // Predicated region
      $region57: #{forward.1} parent=55 // pred_check
        %p725 = pneg %p194
      $region58: #{forward.1} parent=55 // pred_check_branch
        %727 = sbr.rel (%p725) target = $region60
      $region59: #{forward.1} parent=55 // pred_region
        %s728 = smul.u32 8, %s19
        %p729 = scmp.lt.s32.totalorder %s728, 15
        %s730 = scalar_select %p729, %s728, 15
        %s731 = smul.addr %s730, 8
        %s732 = scalar_lea.vmem %s7, %s731
      $region60: #{forward.1} parent=55 // pred_fallthru
        _
    $region56: #{forward.1} parent=5 // pred_fallthru
      _
  $region6: #{forward.1} parent=0 // loop_footer
    %s17 = sadd.s32 1, %s13
  $region7: #{forward.1} parent=0 // loop_footer_branch
    %12 = sbr.rel target = $region3
  $region8: #{forward.1} parent=0 // loop_exit
    _

</llo_original>
